<compile_context>
chip_gen: v5e
topology: v5e:2x2
jax: 0.10.0
libtpu: 0.0.40
codegen_flags: <defaults>
</compile_context>

<pallas_src>
import functools
import math

import jax
import jax.numpy as jnp
from jax.experimental import pallas as pl
from jax.experimental.pallas import tpu as pltpu

# ---------------------------------------------------------------------------
# Lanczos log-gamma, rational form:
#   lgamma(z) = 0.5*log(2*pi) + (z-0.5)*log(t) - t + log(P(z-1)/Q(z-1))
# with t = (z-1) + g + 0.5.  P and Q (degree 8) are built once in float64-ish
# Python arithmetic, so the per-element cost is 2 Horner chains (VPU FMAs),
# one divide and two logs (EUP), instead of 8 divides + 2 logs.
# Valid for z >= 1, which always holds here (alpha = evidence + 1 >= 1).
# ---------------------------------------------------------------------------
_LANCZOS_G = 7.0
_LANCZOS_COEF = (
    0.99999999999980993,
    676.5203681218851,
    -1259.1392167224028,
    771.32342877765313,
    -176.61502916214059,
    12.507343278686905,
    -0.13857109526572012,
    9.9843695780195716e-6,
    1.5056327351493116e-7,
)
_HALF_LOG_2PI = 0.5 * math.log(2.0 * math.pi)


def _poly_mul(a, b):
    out = [0.0] * (len(a) + len(b) - 1)
    for i, x in enumerate(a):
        for j, y in enumerate(b):
            out[i + j] += x * y
    return out


def _lanczos_rational_coeffs():
    n = len(_LANCZOS_COEF) - 1  # 8
    q = [1.0]
    for i in range(1, n + 1):
        q = _poly_mul(q, [1.0, float(i)])          # Q(t) = prod (t + i)
    p = [_LANCZOS_COEF[0] * c for c in q]          # c0 * Q
    for i in range(1, n + 1):
        qi = [1.0]
        for j in range(1, n + 1):
            if j != i:
                qi = _poly_mul(qi, [1.0, float(j)])  # prod_{j != i} (t + j)
        qi = [_LANCZOS_COEF[i] * c for c in qi]
        qi = [0.0] * (len(p) - len(qi)) + qi
        p = [x + y for x, y in zip(p, qi)]
    return tuple(p), tuple(q)


_LANCZOS_P, _LANCZOS_Q = _lanczos_rational_coeffs()


def _horner(coeffs, t):
    acc = jnp.full_like(t, coeffs[0])
    for c in coeffs[1:]:
        acc = acc * t + c
    return acc


def _lgamma(z):
    zm1 = z - 1.0
    num = _horner(_LANCZOS_P, zm1)
    den = _horner(_LANCZOS_Q, zm1)
    t = zm1 + (_LANCZOS_G + 0.5)
    return _HALF_LOG_2PI + (zm1 + 0.5) * jnp.log(t) - t + jnp.log(num / den)


# ---------------------------------------------------------------------------
# Kernel
# ---------------------------------------------------------------------------
def _pg_ece_loss_kernel(alpha_ref, labels_ref, out_ref,
                        logp_acc, ent_acc, bin_acc,
                        *, batch, num_classes, num_bins, n_total):
    B = batch
    C = num_classes
    step = pl.program_id(0)
    nsteps = pl.num_programs(0)

    @pl.when(step == 0)
    def _init():
        logp_acc[...] = jnp.zeros_like(logp_acc)
        ent_acc[...] = jnp.zeros_like(ent_acc)
        bin_acc[...] = jnp.zeros_like(bin_acc)
        out_ref[0, 0] = jnp.float32(0.0)

    # ---- heavy elementwise work on the fully packed (C*B, TN) slab --------
    slab = alpha_ref[...]                 # (C*B, TN) f32, row = c*B + b
    log_a = jnp.log(slab)                 # log(alpha)
    lg_a = _lgamma(slab)                  # lgamma(alpha)
    t1 = (slab - 1.0) * log_a             # (alpha-1)*log(alpha)
    t2 = slab * log_a                     # alpha*log(alpha)
    labels = labels_ref[...]              # (B, TN) int32

    # ---- per-class -> per-sample reductions (contiguous (B, TN) slices) ---
    alpha0 = sum_lg = sum_t1 = sum_t2 = mx = pred = None
    for c in range(C):
        sl = slice(c * B, (c + 1) * B)
        a_c, lg_c, t1_c, t2_c = slab[sl], lg_a[sl], t1[sl], t2[sl]
        if c == 0:
            alpha0, sum_lg, sum_t1, sum_t2 = a_c, lg_c, t1_c, t2_c
            mx = a_c
            pred = jnp.zeros(a_c.shape, jnp.int32)
        else:
            alpha0 = alpha0 + a_c
            sum_lg = sum_lg + lg_c
            sum_t1 = sum_t1 + t1_c
            sum_t2 = sum_t2 + t2_c
            better = a_c > mx
            mx = jnp.where(better, a_c, mx)
            pred = jnp.where(better, jnp.int32(c), pred)

    # ---- per-pixel terms (B, TN), single pass --------------------------------
    log_alpha0 = jnp.log(alpha0)
    inv_alpha0 = pl.reciprocal(alpha0, approx=True)
    lg_alpha0 = _lgamma(alpha0)

    # Dirichlet(alpha).log_prob(expected_prob) with identity calibration:
    #   lgamma(a0) - sum lgamma(a) + sum (a-1)*log(a) - (a0 - C)*log(a0)
    logp_pix = lg_alpha0 - sum_lg + sum_t1 - (alpha0 - float(C)) * log_alpha0
    # -sum_c ep*log(ep)  (1e-6 epsilon dropped; ep > 0 since alpha >= 1)
    ent_pix = log_alpha0 - sum_t2 * inv_alpha0

    logp_acc[...] += logp_pix
    ent_acc[...] += ent_pix

    # ---- fused plugin-ECE bin accumulation -----------------------------------
    conf = mx * inv_alpha0                              # max expected prob
    correct = (pred == labels).astype(jnp.float32)
    diff = correct - conf
    bin_idx = jnp.minimum((conf * float(num_bins)).astype(jnp.int32),
                          num_bins - 1)
    for k in range(num_bins):
        bin_acc[k] += jnp.where(bin_idx == k, diff, 0.0)

    # ---- finalize on the last spatial tile ------------------------------------
    @pl.when(step == nsteps - 1)
    def _finalize():
        inv_n = 1.0 / float(n_total)
        logp_b = jnp.sum(logp_acc[...], axis=1, keepdims=True) * inv_n   # (B,1)
        ece_b = jnp.zeros((B, 1), jnp.float32)
        for k in range(num_bins):
            ece_b = ece_b + jnp.abs(jnp.sum(bin_acc[k], axis=1, keepdims=True))
        ece_b = jnp.maximum(ece_b * inv_n, 1e-12)        # clamp: avoid -log(0)
        neg_log_ece = -jnp.log(ece_b)                    # ece = -log(ece)
        loss_ece = jnp.mean(-logp_b * neg_log_ece)       # scalar
        prob_entropy_mean = jnp.sum(ent_acc[...]) * (inv_n / float(B))
        out_ref[0, 0] = 0.1 * loss_ece - 0.01 * prob_entropy_mean


# ---------------------------------------------------------------------------
# Wrapper
# ---------------------------------------------------------------------------
def _pick_block_n(n, target=4096):
    """Largest divisor of n that is a multiple of 128 and <= target (else n)."""
    if n % 128 != 0:
        return n
    bn = min(n, max(128, target - target % 128))
    while n % bn != 0:
        bn -= 128
    return bn


def policy_gradient_ece_calibration_loss(edl_u, p, alpha, evidence,
                                         num_bins=5, block_n=None):
    """JAX/Pallas forward pass mirroring PolicyGradientECECalibrationLoss."""
    # evidence is only shape bookkeeping in the reference; edl_u feeds the
    # unspecified external ECE class.
    # TODO(synk): edl_u branch of the external ECE class is unspecified; unused
    #             (and intentionally NOT DMA'd into the kernel).
    del edl_u, evidence
    B, C, W, H = alpha.shape
    N = W * H

    # Class-major packed layout: row = c*B + b.  Each class is a contiguous
    # (B, TN) row block; the elementwise hot loop sees a packed (C*B, TN) slab.
    alpha_cb = jnp.transpose(alpha, (1, 0, 2, 3)).reshape(C * B, N)
    alpha_cb = alpha_cb.astype(jnp.float32)
    labels = p.reshape(B, N).astype(jnp.int32)

    if block_n is None:
        block_n = _pick_block_n(N)
    if N % block_n != 0:
        raise ValueError(f"block_n={block_n} must divide W*H={N}")
    grid = (N // block_n,)

    kernel = functools.partial(
        _pg_ece_loss_kernel,
        batch=B, num_classes=C, num_bins=num_bins, n_total=N)

    out = pl.pallas_call(
        kernel,
        out_shape=jax.ShapeDtypeStruct((1, 1), jnp.float32),
        grid_spec=pltpu.PrefetchScalarGridSpec(
            num_scalar_prefetch=0,
            grid=grid,
            in_specs=[
                pl.BlockSpec((C * B, block_n), lambda i: (0, i)),
                pl.BlockSpec((B, block_n), lambda i: (0, i)),
            ],
            out_specs=pl.BlockSpec(memory_space=pltpu.MemorySpace.SMEM),
            scratch_shapes=[
                pltpu.VMEM((B, block_n), jnp.float32),            # log-prob acc
                pltpu.VMEM((B, block_n), jnp.float32),            # entropy acc
                pltpu.VMEM((num_bins, B, block_n), jnp.float32),  # per-bin acc
            ],
        ),
        compiler_params=pltpu.CompilerParams(
            # accumulators are carried across spatial tiles -> "arbitrary"
            dimension_semantics=("arbitrary",),
            vmem_limit_bytes=32 * 1024 * 1024,  # explicit budget (v7x-safe)
        ),
    )(alpha_cb, labels)
    return out[0, 0]


if __name__ == "__main__":
    key = jax.random.PRNGKey(0)
    k_ev, k_lbl = jax.random.split(key)

    B, C, W, H = 2, 4, 16, 16

    # evidence >= 0, alpha = evidence + 1 (standard EDL parameterization)
    evidence = jax.random.uniform(k_ev, (B, C, W, H), minval=0.0, maxval=4.0,
                                  dtype=jnp.float32)
    alpha = evidence + 1.0
    # per-pixel integer labels
    p = jax.random.randint(k_lbl, (B, W, H), 0, C, dtype=jnp.int32)
    # EDL uncertainty u = K / sum(alpha)
    edl_u = C / jnp.sum(alpha, axis=1)

    # block_n=128 -> two spatial tiles, exercising the cross-tile accumulation.
    loss = policy_gradient_ece_calibration_loss(edl_u, p, alpha, evidence,
                                                num_bins=5, block_n=128)
    jax.block_until_ready(loss)
    print("KERNEL_OK")
</pallas_src>

<mosaic_0001>
module attributes {stable_mosaic.version = 11 : i64} {
  func.func @_pg_ece_loss_kernel(%arg0: i32, %arg1: memref<8x128xf32, #tpu.memory_space<vmem>>, %arg2: memref<2x128xi32, #tpu.memory_space<vmem>>, %arg3: memref<1x1xf32, #tpu.memory_space<smem>>, %arg4: memref<2x128xf32, #tpu.memory_space<vmem>>, %arg5: memref<2x128xf32, #tpu.memory_space<vmem>>, %arg6: memref<5x2x128xf32, #tpu.memory_space<vmem>>) attributes {dimension_semantics = [#tpu.dimension_semantics<arbitrary>], iteration_bounds = array<i64: 2>, scalar_prefetch = 0 : i64, scratch_operands = 3 : i64, tpu.core_type = #tpu.core_type<tc>, window_params = [{transform_indices = @transform_0, window_bounds = array<i64: 8, 128>}, {transform_indices = @transform_1, window_bounds = array<i64: 2, 128>}, {transform_indices = @transform_2, window_bounds = array<i64: 1, 1>}]} {
    %c0_i32 = arith.constant 0 : i32
    %0 = arith.cmpi eq, %arg0, %c0_i32 : i32
    %1 = arith.extui %0 : i1 to i32
    %c0_i32_0 = arith.constant 0 : i32
    %2 = arith.cmpi ne, %1, %c0_i32_0 : i32
    scf.if %2 {
      %cst_97 = arith.constant 0.000000e+00 : f32
      %258 = vector.broadcast %cst_97 : f32 to vector<2x128xf32>
      %c0_98 = arith.constant 0 : index
      %c0_99 = arith.constant 0 : index
      %259 = vector.load %arg4[%c0_98, %c0_99] : memref<2x128xf32, #tpu.memory_space<vmem>>, vector<2x128xf32>
      tpu.vector_store %arg4[%c0_98, %c0_99], %258 {strides = array<i32>} : memref<2x128xf32, #tpu.memory_space<vmem>>, vector<2x128xf32>,
      %cst_100 = arith.constant 0.000000e+00 : f32
      %260 = vector.broadcast %cst_100 : f32 to vector<2x128xf32>
      %c0_101 = arith.constant 0 : index
      %c0_102 = arith.constant 0 : index
      %261 = vector.load %arg5[%c0_101, %c0_102] : memref<2x128xf32, #tpu.memory_space<vmem>>, vector<2x128xf32>
      tpu.vector_store %arg5[%c0_101, %c0_102], %260 {strides = array<i32>} : memref<2x128xf32, #tpu.memory_space<vmem>>, vector<2x128xf32>,
      %cst_103 = arith.constant 0.000000e+00 : f32
      %262 = vector.broadcast %cst_103 : f32 to vector<5x2x128xf32>
      %c0_104 = arith.constant 0 : index
      %c0_105 = arith.constant 0 : index
      %c0_106 = arith.constant 0 : index
      %263 = vector.load %arg6[%c0_104, %c0_105, %c0_106] : memref<5x2x128xf32, #tpu.memory_space<vmem>>, vector<5x2x128xf32>
      tpu.vector_store %arg6[%c0_104, %c0_105, %c0_106], %262 {strides = array<i32>} : memref<5x2x128xf32, #tpu.memory_space<vmem>>, vector<5x2x128xf32>,
      %cst_107 = arith.constant 0.000000e+00 : f32
      %c0_108 = arith.constant 0 : index
      %c0_109 = arith.constant 0 : index
      %264 = memref.load %arg3[%c0_108, %c0_109] : memref<1x1xf32, #tpu.memory_space<smem>>
      memref.store %cst_107, %arg3[%c0_108, %c0_109] : memref<1x1xf32, #tpu.memory_space<smem>>
    } else {
    }
    %c0 = arith.constant 0 : index
    %c0_1 = arith.constant 0 : index
    %3 = vector.load %arg1[%c0, %c0_1] : memref<8x128xf32, #tpu.memory_space<vmem>>, vector<8x128xf32>
    %4 = math.log %3 : vector<8x128xf32>
    %cst = arith.constant 1.000000e+00 : f32
    %5 = vector.broadcast %cst : f32 to vector<8x128xf32>
    %6 = arith.subf %3, %5 : vector<8x128xf32>
    %cst_2 = arith.constant 1.000000e+00 : f32
    %7 = vector.broadcast %cst_2 : f32 to vector<8x128xf32>
    %8 = arith.mulf %7, %6 : vector<8x128xf32>
    %cst_3 = arith.constant 60.4583321 : f32
    %9 = vector.broadcast %cst_3 : f32 to vector<8x128xf32>
    %10 = arith.addf %8, %9 : vector<8x128xf32>
    %11 = arith.mulf %10, %6 : vector<8x128xf32>
    %cst_4 = arith.constant 1599.04248 : f32
    %12 = vector.broadcast %cst_4 : f32 to vector<8x128xf32>
    %13 = arith.addf %11, %12 : vector<8x128xf32>
    %14 = arith.mulf %13, %6 : vector<8x128xf32>
    %cst_5 = arith.constant 24165.5098 : f32
    %15 = vector.broadcast %cst_5 : f32 to vector<8x128xf32>
    %16 = arith.addf %14, %15 : vector<8x128xf32>
    %17 = arith.mulf %16, %6 : vector<8x128xf32>
    %cst_6 = arith.constant 228235.219 : f32
    %18 = vector.broadcast %cst_6 : f32 to vector<8x128xf32>
    %19 = arith.addf %17, %18 : vector<8x128xf32>
    %20 = arith.mulf %19, %6 : vector<8x128xf32>
    %cst_7 = arith.constant 1379496.25 : f32
    %21 = vector.broadcast %cst_7 : f32 to vector<8x128xf32>
    %22 = arith.addf %20, %21 : vector<8x128xf32>
    %23 = arith.mulf %22, %6 : vector<8x128xf32>
    %cst_8 = arith.constant 0x4A9F05EA : f32
    %24 = vector.broadcast %cst_8 : f32 to vector<8x128xf32>
    %25 = arith.addf %23, %24 : vector<8x128xf32>
    %26 = arith.mulf %25, %6 : vector<8x128xf32>
    %cst_9 = arith.constant 0x4B2B9D51 : f32
    %27 = vector.broadcast %cst_9 : f32 to vector<8x128xf32>
    %28 = arith.addf %26, %27 : vector<8x128xf32>
    %29 = arith.mulf %28, %6 : vector<8x128xf32>
    %cst_10 = arith.constant 0x4B220ADA : f32
    %30 = vector.broadcast %cst_10 : f32 to vector<8x128xf32>
    %31 = arith.addf %29, %30 : vector<8x128xf32>
    %cst_11 = arith.constant 1.000000e+00 : f32
    %32 = vector.broadcast %cst_11 : f32 to vector<8x128xf32>
    %33 = arith.mulf %32, %6 : vector<8x128xf32>
    %cst_12 = arith.constant 3.600000e+01 : f32
    %34 = vector.broadcast %cst_12 : f32 to vector<8x128xf32>
    %35 = arith.addf %33, %34 : vector<8x128xf32>
    %36 = arith.mulf %35, %6 : vector<8x128xf32>
    %cst_13 = arith.constant 5.460000e+02 : f32
    %37 = vector.broadcast %cst_13 : f32 to vector<8x128xf32>
    %38 = arith.addf %36, %37 : vector<8x128xf32>
    %39 = arith.mulf %38, %6 : vector<8x128xf32>
    %cst_14 = arith.constant 4.536000e+03 : f32
    %40 = vector.broadcast %cst_14 : f32 to vector<8x128xf32>
    %41 = arith.addf %39, %40 : vector<8x128xf32>
    %42 = arith.mulf %41, %6 : vector<8x128xf32>
    %cst_15 = arith.constant 2.244900e+04 : f32
    %43 = vector.broadcast %cst_15 : f32 to vector<8x128xf32>
    %44 = arith.addf %42, %43 : vector<8x128xf32>
    %45 = arith.mulf %44, %6 : vector<8x128xf32>
    %cst_16 = arith.constant 6.728400e+04 : f32
    %46 = vector.broadcast %cst_16 : f32 to vector<8x128xf32>
    %47 = arith.addf %45, %46 : vector<8x128xf32>
    %48 = arith.mulf %47, %6 : vector<8x128xf32>
    %cst_17 = arith.constant 1.181240e+05 : f32
    %49 = vector.broadcast %cst_17 : f32 to vector<8x128xf32>
    %50 = arith.addf %48, %49 : vector<8x128xf32>
    %51 = arith.mulf %50, %6 : vector<8x128xf32>
    %cst_18 = arith.constant 1.095840e+05 : f32
    %52 = vector.broadcast %cst_18 : f32 to vector<8x128xf32>
    %53 = arith.addf %51, %52 : vector<8x128xf32>
    %54 = arith.mulf %53, %6 : vector<8x128xf32>
    %cst_19 = arith.constant 4.032000e+04 : f32
    %55 = vector.broadcast %cst_19 : f32 to vector<8x128xf32>
    %56 = arith.addf %54, %55 : vector<8x128xf32>
    %cst_20 = arith.constant 7.500000e+00 : f32
    %57 = vector.broadcast %cst_20 : f32 to vector<8x128xf32>
    %58 = arith.addf %6, %57 : vector<8x128xf32>
    %cst_21 = arith.constant 5.000000e-01 : f32
    %59 = vector.broadcast %cst_21 : f32 to vector<8x128xf32>
    %60 = arith.addf %6, %59 : vector<8x128xf32>
    %61 = math.log %58 : vector<8x128xf32>
    %62 = arith.mulf %60, %61 : vector<8x128xf32>
    %cst_22 = arith.constant 0.918938517 : f32
    %63 = vector.broadcast %cst_22 : f32 to vector<8x128xf32>
    %64 = arith.addf %63, %62 : vector<8x128xf32>
    %65 = arith.subf %64, %58 : vector<8x128xf32>
    %66 = arith.divf %31, %56 : vector<8x128xf32>
    %67 = math.log %66 : vector<8x128xf32>
    %68 = arith.addf %65, %67 : vector<8x128xf32>
    %cst_23 = arith.constant 1.000000e+00 : f32
    %69 = vector.broadcast %cst_23 : f32 to vector<8x128xf32>
    %70 = arith.subf %3, %69 : vector<8x128xf32>
    %71 = arith.mulf %70, %4 : vector<8x128xf32>
    %72 = arith.mulf %3, %4 : vector<8x128xf32>
    %c0_24 = arith.constant 0 : index
    %c0_25 = arith.constant 0 : index
    %73 = vector.load %arg2[%c0_24, %c0_25] : memref<2x128xi32, #tpu.memory_space<vmem>>, vector<2x128xi32>
    %74 = vector.extract_strided_slice %3 {offsets = [0, 0], sizes = [2, 128], strides = [1, 1]} : vector<8x128xf32> to vector<2x128xf32>
    %75 = vector.extract_strided_slice %68 {offsets = [0, 0], sizes = [2, 128], strides = [1, 1]} : vector<8x128xf32> to vector<2x128xf32>
    %76 = vector.extract_strided_slice %71 {offsets = [0, 0], sizes = [2, 128], strides = [1, 1]} : vector<8x128xf32> to vector<2x128xf32>
    %77 = vector.extract_strided_slice %72 {offsets = [0, 0], sizes = [2, 128], strides = [1, 1]} : vector<8x128xf32> to vector<2x128xf32>
    %c0_i32_26 = arith.constant 0 : i32
    %78 = vector.broadcast %c0_i32_26 : i32 to vector<2x128xi32>
    %79 = vector.extract_strided_slice %3 {offsets = [2, 0], sizes = [2, 128], strides = [1, 1]} : vector<8x128xf32> to vector<2x128xf32>
    %80 = vector.extract_strided_slice %68 {offsets = [2, 0], sizes = [2, 128], strides = [1, 1]} : vector<8x128xf32> to vector<2x128xf32>
    %81 = vector.extract_strided_slice %71 {offsets = [2, 0], sizes = [2, 128], strides = [1, 1]} : vector<8x128xf32> to vector<2x128xf32>
    %82 = vector.extract_strided_slice %72 {offsets = [2, 0], sizes = [2, 128], strides = [1, 1]} : vector<8x128xf32> to vector<2x128xf32>
    %83 = arith.addf %74, %79 : vector<2x128xf32>
    %84 = arith.addf %75, %80 : vector<2x128xf32>
    %85 = arith.addf %76, %81 : vector<2x128xf32>
    %86 = arith.addf %77, %82 : vector<2x128xf32>
    %87 = arith.cmpf ogt, %79, %74 : vector<2x128xf32>
    %88 = arith.select %87, %79, %74 : vector<2x128xi1>, vector<2x128xf32>
    %c1_i32 = arith.constant 1 : i32
    %89 = vector.broadcast %c1_i32 : i32 to vector<2x128xi32>
    %90 = arith.select %87, %89, %78 : vector<2x128xi1>, vector<2x128xi32>
    %91 = vector.extract_strided_slice %3 {offsets = [4, 0], sizes = [2, 128], strides = [1, 1]} : vector<8x128xf32> to vector<2x128xf32>
    %92 = vector.extract_strided_slice %68 {offsets = [4, 0], sizes = [2, 128], strides = [1, 1]} : vector<8x128xf32> to vector<2x128xf32>
    %93 = vector.extract_strided_slice %71 {offsets = [4, 0], sizes = [2, 128], strides = [1, 1]} : vector<8x128xf32> to vector<2x128xf32>
    %94 = vector.extract_strided_slice %72 {offsets = [4, 0], sizes = [2, 128], strides = [1, 1]} : vector<8x128xf32> to vector<2x128xf32>
    %95 = arith.addf %83, %91 : vector<2x128xf32>
    %96 = arith.addf %84, %92 : vector<2x128xf32>
    %97 = arith.addf %85, %93 : vector<2x128xf32>
    %98 = arith.addf %86, %94 : vector<2x128xf32>
    %99 = arith.cmpf ogt, %91, %88 : vector<2x128xf32>
    %100 = arith.select %99, %91, %88 : vector<2x128xi1>, vector<2x128xf32>
    %c2_i32 = arith.constant 2 : i32
    %101 = vector.broadcast %c2_i32 : i32 to vector<2x128xi32>
    %102 = arith.select %99, %101, %90 : vector<2x128xi1>, vector<2x128xi32>
    %103 = vector.extract_strided_slice %3 {offsets = [6, 0], sizes = [2, 128], strides = [1, 1]} : vector<8x128xf32> to vector<2x128xf32>
    %104 = vector.extract_strided_slice %68 {offsets = [6, 0], sizes = [2, 128], strides = [1, 1]} : vector<8x128xf32> to vector<2x128xf32>
    %105 = vector.extract_strided_slice %71 {offsets = [6, 0], sizes = [2, 128], strides = [1, 1]} : vector<8x128xf32> to vector<2x128xf32>
    %106 = vector.extract_strided_slice %72 {offsets = [6, 0], sizes = [2, 128], strides = [1, 1]} : vector<8x128xf32> to vector<2x128xf32>
    %107 = arith.addf %95, %103 : vector<2x128xf32>
    %108 = arith.addf %96, %104 : vector<2x128xf32>
    %109 = arith.addf %97, %105 : vector<2x128xf32>
    %110 = arith.addf %98, %106 : vector<2x128xf32>
    %111 = arith.cmpf ogt, %103, %100 : vector<2x128xf32>
    %112 = arith.select %111, %103, %100 : vector<2x128xi1>, vector<2x128xf32>
    %c3_i32 = arith.constant 3 : i32
    %113 = vector.broadcast %c3_i32 : i32 to vector<2x128xi32>
    %114 = arith.select %111, %113, %102 : vector<2x128xi1>, vector<2x128xi32>
    %115 = math.log %107 : vector<2x128xf32>
    %116 = tpu.reciprocal %107 {approx = true} : vector<2x128xf32> -> vector<2x128xf32>
    %cst_27 = arith.constant 1.000000e+00 : f32
    %117 = vector.broadcast %cst_27 : f32 to vector<2x128xf32>
    %118 = arith.subf %107, %117 : vector<2x128xf32>
    %cst_28 = arith.constant 1.000000e+00 : f32
    %119 = vector.broadcast %cst_28 : f32 to vector<2x128xf32>
    %120 = arith.mulf %119, %118 : vector<2x128xf32>
    %cst_29 = arith.constant 60.4583321 : f32
    %121 = vector.broadcast %cst_29 : f32 to vector<2x128xf32>
    %122 = arith.addf %120, %121 : vector<2x128xf32>
    %123 = arith.mulf %122, %118 : vector<2x128xf32>
    %cst_30 = arith.constant 1599.04248 : f32
    %124 = vector.broadcast %cst_30 : f32 to vector<2x128xf32>
    %125 = arith.addf %123, %124 : vector<2x128xf32>
    %126 = arith.mulf %125, %118 : vector<2x128xf32>
    %cst_31 = arith.constant 24165.5098 : f32
    %127 = vector.broadcast %cst_31 : f32 to vector<2x128xf32>
    %128 = arith.addf %126, %127 : vector<2x128xf32>
    %129 = arith.mulf %128, %118 : vector<2x128xf32>
    %cst_32 = arith.constant 228235.219 : f32
    %130 = vector.broadcast %cst_32 : f32 to vector<2x128xf32>
    %131 = arith.addf %129, %130 : vector<2x128xf32>
    %132 = arith.mulf %131, %118 : vector<2x128xf32>
    %cst_33 = arith.constant 1379496.25 : f32
    %133 = vector.broadcast %cst_33 : f32 to vector<2x128xf32>
    %134 = arith.addf %132, %133 : vector<2x128xf32>
    %135 = arith.mulf %134, %118 : vector<2x128xf32>
    %cst_34 = arith.constant 0x4A9F05EA : f32
    %136 = vector.broadcast %cst_34 : f32 to vector<2x128xf32>
    %137 = arith.addf %135, %136 : vector<2x128xf32>
    %138 = arith.mulf %137, %118 : vector<2x128xf32>
    %cst_35 = arith.constant 0x4B2B9D51 : f32
    %139 = vector.broadcast %cst_35 : f32 to vector<2x128xf32>
    %140 = arith.addf %138, %139 : vector<2x128xf32>
    %141 = arith.mulf %140, %118 : vector<2x128xf32>
    %cst_36 = arith.constant 0x4B220ADA : f32
    %142 = vector.broadcast %cst_36 : f32 to vector<2x128xf32>
    %143 = arith.addf %141, %142 : vector<2x128xf32>
    %cst_37 = arith.constant 1.000000e+00 : f32
    %144 = vector.broadcast %cst_37 : f32 to vector<2x128xf32>
    %145 = arith.mulf %144, %118 : vector<2x128xf32>
    %cst_38 = arith.constant 3.600000e+01 : f32
    %146 = vector.broadcast %cst_38 : f32 to vector<2x128xf32>
    %147 = arith.addf %145, %146 : vector<2x128xf32>
    %148 = arith.mulf %147, %118 : vector<2x128xf32>
    %cst_39 = arith.constant 5.460000e+02 : f32
    %149 = vector.broadcast %cst_39 : f32 to vector<2x128xf32>
    %150 = arith.addf %148, %149 : vector<2x128xf32>
    %151 = arith.mulf %150, %118 : vector<2x128xf32>
    %cst_40 = arith.constant 4.536000e+03 : f32
    %152 = vector.broadcast %cst_40 : f32 to vector<2x128xf32>
    %153 = arith.addf %151, %152 : vector<2x128xf32>
    %154 = arith.mulf %153, %118 : vector<2x128xf32>
    %cst_41 = arith.constant 2.244900e+04 : f32
    %155 = vector.broadcast %cst_41 : f32 to vector<2x128xf32>
    %156 = arith.addf %154, %155 : vector<2x128xf32>
    %157 = arith.mulf %156, %118 : vector<2x128xf32>
    %cst_42 = arith.constant 6.728400e+04 : f32
    %158 = vector.broadcast %cst_42 : f32 to vector<2x128xf32>
    %159 = arith.addf %157, %158 : vector<2x128xf32>
    %160 = arith.mulf %159, %118 : vector<2x128xf32>
    %cst_43 = arith.constant 1.181240e+05 : f32
    %161 = vector.broadcast %cst_43 : f32 to vector<2x128xf32>
    %162 = arith.addf %160, %161 : vector<2x128xf32>
    %163 = arith.mulf %162, %118 : vector<2x128xf32>
    %cst_44 = arith.constant 1.095840e+05 : f32
    %164 = vector.broadcast %cst_44 : f32 to vector<2x128xf32>
    %165 = arith.addf %163, %164 : vector<2x128xf32>
    %166 = arith.mulf %165, %118 : vector<2x128xf32>
    %cst_45 = arith.constant 4.032000e+04 : f32
    %167 = vector.broadcast %cst_45 : f32 to vector<2x128xf32>
    %168 = arith.addf %166, %167 : vector<2x128xf32>
    %cst_46 = arith.constant 7.500000e+00 : f32
    %169 = vector.broadcast %cst_46 : f32 to vector<2x128xf32>
    %170 = arith.addf %118, %169 : vector<2x128xf32>
    %cst_47 = arith.constant 5.000000e-01 : f32
    %171 = vector.broadcast %cst_47 : f32 to vector<2x128xf32>
    %172 = arith.addf %118, %171 : vector<2x128xf32>
    %173 = math.log %170 : vector<2x128xf32>
    %174 = arith.mulf %172, %173 : vector<2x128xf32>
    %cst_48 = arith.constant 0.918938517 : f32
    %175 = vector.broadcast %cst_48 : f32 to vector<2x128xf32>
    %176 = arith.addf %175, %174 : vector<2x128xf32>
    %177 = arith.subf %176, %170 : vector<2x128xf32>
    %178 = arith.divf %143, %168 : vector<2x128xf32>
    %179 = math.log %178 : vector<2x128xf32>
    %180 = arith.addf %177, %179 : vector<2x128xf32>
    %181 = arith.subf %180, %108 : vector<2x128xf32>
    %182 = arith.addf %181, %109 : vector<2x128xf32>
    %cst_49 = arith.constant 4.000000e+00 : f32
    %183 = vector.broadcast %cst_49 : f32 to vector<2x128xf32>
    %184 = arith.subf %107, %183 : vector<2x128xf32>
    %185 = arith.mulf %184, %115 : vector<2x128xf32>
    %186 = arith.subf %182, %185 : vector<2x128xf32>
    %187 = arith.mulf %110, %116 : vector<2x128xf32>
    %188 = arith.subf %115, %187 : vector<2x128xf32>
    %c0_50 = arith.constant 0 : index
    %c0_51 = arith.constant 0 : index
    %189 = vector.load %arg4[%c0_50, %c0_51] : memref<2x128xf32, #tpu.memory_space<vmem>>, vector<2x128xf32>
    %190 = arith.addf %189, %186 : vector<2x128xf32>
    %c0_52 = arith.constant 0 : index
    %c0_53 = arith.constant 0 : index
    %191 = vector.load %arg4[%c0_52, %c0_53] : memref<2x128xf32, #tpu.memory_space<vmem>>, vector<2x128xf32>
    tpu.vector_store %arg4[%c0_52, %c0_53], %190 {strides = array<i32>} : memref<2x128xf32, #tpu.memory_space<vmem>>, vector<2x128xf32>,
    %c0_54 = arith.constant 0 : index
    %c0_55 = arith.constant 0 : index
    %192 = vector.load %arg5[%c0_54, %c0_55] : memref<2x128xf32, #tpu.memory_space<vmem>>, vector<2x128xf32>
    %193 = arith.addf %192, %188 : vector<2x128xf32>
    %c0_56 = arith.constant 0 : index
    %c0_57 = arith.constant 0 : index
    %194 = vector.load %arg5[%c0_56, %c0_57] : memref<2x128xf32, #tpu.memory_space<vmem>>, vector<2x128xf32>
    tpu.vector_store %arg5[%c0_56, %c0_57], %193 {strides = array<i32>} : memref<2x128xf32, #tpu.memory_space<vmem>>, vector<2x128xf32>,
    %195 = arith.mulf %112, %116 : vector<2x128xf32>
    %196 = arith.cmpi eq, %114, %73 : vector<2x128xi32>
    %197 = arith.extui %196 : vector<2x128xi1> to vector<2x128xi32>
    %198 = arith.sitofp %197 : vector<2x128xi32> to vector<2x128xf32>
    %199 = arith.subf %198, %195 : vector<2x128xf32>
    %cst_58 = arith.constant 5.000000e+00 : f32
    %200 = vector.broadcast %cst_58 : f32 to vector<2x128xf32>
    %201 = arith.mulf %195, %200 : vector<2x128xf32>
    %202 = arith.fptosi %201 : vector<2x128xf32> to vector<2x128xi32>
    %c4_i32 = arith.constant 4 : i32
    %203 = vector.broadcast %c4_i32 : i32 to vector<2x128xi32>
    %204 = arith.minsi %202, %203 : vector<2x128xi32>
    %c0_59 = arith.constant 0 : index
    %c0_60 = arith.constant 0 : index
    %c0_61 = arith.constant 0 : index
    %205 = vector.load %arg6[%c0_59, %c0_60, %c0_61] : memref<5x2x128xf32, #tpu.memory_space<vmem>>, vector<1x2x128xf32>
    %206 = vector.shape_cast %205 : vector<1x2x128xf32> to vector<2x128xf32>
    %c0_i32_62 = arith.constant 0 : i32
    %207 = vector.broadcast %c0_i32_62 : i32 to vector<2x128xi32>
    %208 = arith.cmpi eq, %204, %207 : vector<2x128xi32>
    %cst_63 = arith.constant 0.000000e+00 : f32
    %209 = vector.broadcast %cst_63 : f32 to vector<2x128xf32>
    %210 = arith.select %208, %199, %209 : vector<2x128xi1>, vector<2x128xf32>
    %211 = arith.addf %206, %210 : vector<2x128xf32>
    %c0_64 = arith.constant 0 : index
    %c0_65 = arith.constant 0 : index
    %c0_66 = arith.constant 0 : index
    %212 = vector.load %arg6[%c0_64, %c0_65, %c0_66] : memref<5x2x128xf32, #tpu.memory_space<vmem>>, vector<1x2x128xf32>
    %213 = vector.shape_cast %212 : vector<1x2x128xf32> to vector<2x128xf32>
    %214 = vector.shape_cast %211 : vector<2x128xf32> to vector<1x2x128xf32>
    tpu.vector_store %arg6[%c0_64, %c0_65, %c0_66], %214 {strides = array<i32>} : memref<5x2x128xf32, #tpu.memory_space<vmem>>, vector<1x2x128xf32>,
    %c1 = arith.constant 1 : index
    %c0_67 = arith.constant 0 : index
    %c0_68 = arith.constant 0 : index
    %215 = vector.load %arg6[%c1, %c0_67, %c0_68] : memref<5x2x128xf32, #tpu.memory_space<vmem>>, vector<1x2x128xf32>
    %216 = vector.shape_cast %215 : vector<1x2x128xf32> to vector<2x128xf32>
    %c1_i32_69 = arith.constant 1 : i32
    %217 = vector.broadcast %c1_i32_69 : i32 to vector<2x128xi32>
    %218 = arith.cmpi eq, %204, %217 : vector<2x128xi32>
    %cst_70 = arith.constant 0.000000e+00 : f32
    %219 = vector.broadcast %cst_70 : f32 to vector<2x128xf32>
    %220 = arith.select %218, %199, %219 : vector<2x128xi1>, vector<2x128xf32>
    %221 = arith.addf %216, %220 : vector<2x128xf32>
    %c1_71 = arith.constant 1 : index
    %c0_72 = arith.constant 0 : index
    %c0_73 = arith.constant 0 : index
    %222 = vector.load %arg6[%c1_71, %c0_72, %c0_73] : memref<5x2x128xf32, #tpu.memory_space<vmem>>, vector<1x2x128xf32>
    %223 = vector.shape_cast %222 : vector<1x2x128xf32> to vector<2x128xf32>
    %224 = vector.shape_cast %221 : vector<2x128xf32> to vector<1x2x128xf32>
    tpu.vector_store %arg6[%c1_71, %c0_72, %c0_73], %224 {strides = array<i32>} : memref<5x2x128xf32, #tpu.memory_space<vmem>>, vector<1x2x128xf32>,
    %c2 = arith.constant 2 : index
    %c0_74 = arith.constant 0 : index
    %c0_75 = arith.constant 0 : index
    %225 = vector.load %arg6[%c2, %c0_74, %c0_75] : memref<5x2x128xf32, #tpu.memory_space<vmem>>, vector<1x2x128xf32>
    %226 = vector.shape_cast %225 : vector<1x2x128xf32> to vector<2x128xf32>
    %c2_i32_76 = arith.constant 2 : i32
    %227 = vector.broadcast %c2_i32_76 : i32 to vector<2x128xi32>
    %228 = arith.cmpi eq, %204, %227 : vector<2x128xi32>
    %cst_77 = arith.constant 0.000000e+00 : f32
    %229 = vector.broadcast %cst_77 : f32 to vector<2x128xf32>
    %230 = arith.select %228, %199, %229 : vector<2x128xi1>, vector<2x128xf32>
    %231 = arith.addf %226, %230 : vector<2x128xf32>
    %c2_78 = arith.constant 2 : index
    %c0_79 = arith.constant 0 : index
    %c0_80 = arith.constant 0 : index
    %232 = vector.load %arg6[%c2_78, %c0_79, %c0_80] : memref<5x2x128xf32, #tpu.memory_space<vmem>>, vector<1x2x128xf32>
    %233 = vector.shape_cast %232 : vector<1x2x128xf32> to vector<2x128xf32>
    %234 = vector.shape_cast %231 : vector<2x128xf32> to vector<1x2x128xf32>
    tpu.vector_store %arg6[%c2_78, %c0_79, %c0_80], %234 {strides = array<i32>} : memref<5x2x128xf32, #tpu.memory_space<vmem>>, vector<1x2x128xf32>,
    %c3 = arith.constant 3 : index
    %c0_81 = arith.constant 0 : index
    %c0_82 = arith.constant 0 : index
    %235 = vector.load %arg6[%c3, %c0_81, %c0_82] : memref<5x2x128xf32, #tpu.memory_space<vmem>>, vector<1x2x128xf32>
    %236 = vector.shape_cast %235 : vector<1x2x128xf32> to vector<2x128xf32>
    %c3_i32_83 = arith.constant 3 : i32
    %237 = vector.broadcast %c3_i32_83 : i32 to vector<2x128xi32>
    %238 = arith.cmpi eq, %204, %237 : vector<2x128xi32>
    %cst_84 = arith.constant 0.000000e+00 : f32
    %239 = vector.broadcast %cst_84 : f32 to vector<2x128xf32>
    %240 = arith.select %238, %199, %239 : vector<2x128xi1>, vector<2x128xf32>
    %241 = arith.addf %236, %240 : vector<2x128xf32>
    %c3_85 = arith.constant 3 : index
    %c0_86 = arith.constant 0 : index
    %c0_87 = arith.constant 0 : index
    %242 = vector.load %arg6[%c3_85, %c0_86, %c0_87] : memref<5x2x128xf32, #tpu.memory_space<vmem>>, vector<1x2x128xf32>
    %243 = vector.shape_cast %242 : vector<1x2x128xf32> to vector<2x128xf32>
    %244 = vector.shape_cast %241 : vector<2x128xf32> to vector<1x2x128xf32>
    tpu.vector_store %arg6[%c3_85, %c0_86, %c0_87], %244 {strides = array<i32>} : memref<5x2x128xf32, #tpu.memory_space<vmem>>, vector<1x2x128xf32>,
    %c4 = arith.constant 4 : index
    %c0_88 = arith.constant 0 : index
    %c0_89 = arith.constant 0 : index
    %245 = vector.load %arg6[%c4, %c0_88, %c0_89] : memref<5x2x128xf32, #tpu.memory_space<vmem>>, vector<1x2x128xf32>
    %246 = vector.shape_cast %245 : vector<1x2x128xf32> to vector<2x128xf32>
    %c4_i32_90 = arith.constant 4 : i32
    %247 = vector.broadcast %c4_i32_90 : i32 to vector<2x128xi32>
    %248 = arith.cmpi eq, %204, %247 : vector<2x128xi32>
    %cst_91 = arith.constant 0.000000e+00 : f32
    %249 = vector.broadcast %cst_91 : f32 to vector<2x128xf32>
    %250 = arith.select %248, %199, %249 : vector<2x128xi1>, vector<2x128xf32>
    %251 = arith.addf %246, %250 : vector<2x128xf32>
    %c4_92 = arith.constant 4 : index
    %c0_93 = arith.constant 0 : index
    %c0_94 = arith.constant 0 : index
    %252 = vector.load %arg6[%c4_92, %c0_93, %c0_94] : memref<5x2x128xf32, #tpu.memory_space<vmem>>, vector<1x2x128xf32>
    %253 = vector.shape_cast %252 : vector<1x2x128xf32> to vector<2x128xf32>
    %254 = vector.shape_cast %251 : vector<2x128xf32> to vector<1x2x128xf32>
    tpu.vector_store %arg6[%c4_92, %c0_93, %c0_94], %254 {strides = array<i32>} : memref<5x2x128xf32, #tpu.memory_space<vmem>>, vector<1x2x128xf32>,
    %c1_i32_95 = arith.constant 1 : i32
    %255 = arith.cmpi eq, %arg0, %c1_i32_95 : i32
    %256 = arith.extui %255 : i1 to i32
    %c0_i32_96 = arith.constant 0 : i32
    %257 = arith.cmpi ne, %256, %c0_i32_96 : i32
    scf.if %257 {
      %c0_97 = arith.constant 0 : index
      %c0_98 = arith.constant 0 : index
      %258 = vector.load %arg4[%c0_97, %c0_98] : memref<2x128xf32, #tpu.memory_space<vmem>>, vector<2x128xf32>
      %cst_99 = arith.constant dense<0.000000e+00> : vector<2xf32>
      %259 = vector.multi_reduction <add>, %258, %cst_99 [1] : vector<2x128xf32> to vector<2xf32>
      %260 = vector.shape_cast %259 : vector<2xf32> to vector<2x1xf32>
      %cst_100 = arith.constant 3.906250e-03 : f32
      %261 = vector.broadcast %cst_100 : f32 to vector<2x1xf32>
      %262 = arith.mulf %260, %261 : vector<2x1xf32>
      %cst_101 = arith.constant 0.000000e+00 : f32
      %263 = vector.broadcast %cst_101 : f32 to vector<2x1xf32>
      %c0_102 = arith.constant 0 : index
      %c0_103 = arith.constant 0 : index
      %c0_104 = arith.constant 0 : index
      %264 = vector.load %arg6[%c0_102, %c0_103, %c0_104] : memref<5x2x128xf32, #tpu.memory_space<vmem>>, vector<1x2x128xf32>
      %265 = vector.shape_cast %264 : vector<1x2x128xf32> to vector<2x128xf32>
      %cst_105 = arith.constant dense<0.000000e+00> : vector<2xf32>
      %266 = vector.multi_reduction <add>, %265, %cst_105 [1] : vector<2x128xf32> to vector<2xf32>
      %267 = vector.shape_cast %266 : vector<2xf32> to vector<2x1xf32>
      %268 = math.absf %267 : vector<2x1xf32>
      %269 = arith.addf %263, %268 : vector<2x1xf32>
      %c1_106 = arith.constant 1 : index
      %c0_107 = arith.constant 0 : index
      %c0_108 = arith.constant 0 : index
      %270 = vector.load %arg6[%c1_106, %c0_107, %c0_108] : memref<5x2x128xf32, #tpu.memory_space<vmem>>, vector<1x2x128xf32>
      %271 = vector.shape_cast %270 : vector<1x2x128xf32> to vector<2x128xf32>
      %cst_109 = arith.constant dense<0.000000e+00> : vector<2xf32>
      %272 = vector.multi_reduction <add>, %271, %cst_109 [1] : vector<2x128xf32> to vector<2xf32>
      %273 = vector.shape_cast %272 : vector<2xf32> to vector<2x1xf32>
      %274 = math.absf %273 : vector<2x1xf32>
      %275 = arith.addf %269, %274 : vector<2x1xf32>
      %c2_110 = arith.constant 2 : index
      %c0_111 = arith.constant 0 : index
      %c0_112 = arith.constant 0 : index
      %276 = vector.load %arg6[%c2_110, %c0_111, %c0_112] : memref<5x2x128xf32, #tpu.memory_space<vmem>>, vector<1x2x128xf32>
      %277 = vector.shape_cast %276 : vector<1x2x128xf32> to vector<2x128xf32>
      %cst_113 = arith.constant dense<0.000000e+00> : vector<2xf32>
      %278 = vector.multi_reduction <add>, %277, %cst_113 [1] : vector<2x128xf32> to vector<2xf32>
      %279 = vector.shape_cast %278 : vector<2xf32> to vector<2x1xf32>
      %280 = math.absf %279 : vector<2x1xf32>
      %281 = arith.addf %275, %280 : vector<2x1xf32>
      %c3_114 = arith.constant 3 : index
      %c0_115 = arith.constant 0 : index
      %c0_116 = arith.constant 0 : index
      %282 = vector.load %arg6[%c3_114, %c0_115, %c0_116] : memref<5x2x128xf32, #tpu.memory_space<vmem>>, vector<1x2x128xf32>
      %283 = vector.shape_cast %282 : vector<1x2x128xf32> to vector<2x128xf32>
      %cst_117 = arith.constant dense<0.000000e+00> : vector<2xf32>
      %284 = vector.multi_reduction <add>, %283, %cst_117 [1] : vector<2x128xf32> to vector<2xf32>
      %285 = vector.shape_cast %284 : vector<2xf32> to vector<2x1xf32>
      %286 = math.absf %285 : vector<2x1xf32>
      %287 = arith.addf %281, %286 : vector<2x1xf32>
      %c4_118 = arith.constant 4 : index
      %c0_119 = arith.constant 0 : index
      %c0_120 = arith.constant 0 : index
      %288 = vector.load %arg6[%c4_118, %c0_119, %c0_120] : memref<5x2x128xf32, #tpu.memory_space<vmem>>, vector<1x2x128xf32>
      %289 = vector.shape_cast %288 : vector<1x2x128xf32> to vector<2x128xf32>
      %cst_121 = arith.constant dense<0.000000e+00> : vector<2xf32>
      %290 = vector.multi_reduction <add>, %289, %cst_121 [1] : vector<2x128xf32> to vector<2xf32>
      %291 = vector.shape_cast %290 : vector<2xf32> to vector<2x1xf32>
      %292 = math.absf %291 : vector<2x1xf32>
      %293 = arith.addf %287, %292 : vector<2x1xf32>
      %cst_122 = arith.constant 3.906250e-03 : f32
      %294 = vector.broadcast %cst_122 : f32 to vector<2x1xf32>
      %295 = arith.mulf %293, %294 : vector<2x1xf32>
      %cst_123 = arith.constant 9.99999996E-13 : f32
      %296 = vector.broadcast %cst_123 : f32 to vector<2x1xf32>
      %297 = arith.maximumf %295, %296 : vector<2x1xf32>
      %298 = math.log %297 : vector<2x1xf32>
      %cst_124 = arith.constant 0.000000e+00 : f32
      %299 = vector.broadcast %cst_124 : f32 to vector<2x1xf32>
      %300 = arith.subf %299, %298 : vector<2x1xf32>
      %cst_125 = arith.constant 0.000000e+00 : f32
      %301 = vector.broadcast %cst_125 : f32 to vector<2x1xf32>
      %302 = arith.subf %301, %262 : vector<2x1xf32>
      %303 = arith.mulf %302, %300 : vector<2x1xf32>
      %304 = vector.shape_cast %303 : vector<2x1xf32> to vector<1x2x1xf32>
      %cst_126 = arith.constant dense<0.000000e+00> : vector<1xf32>
      %305 = vector.multi_reduction <add>, %304, %cst_126 [1, 2] : vector<1x2x1xf32> to vector<1xf32>
      %306 = vector.shape_cast %305 : vector<1xf32> to vector<1x1x1xf32>
      %307 = vector.extract %306[0, 0, 0] : f32 from vector<1x1x1xf32>
      %cst_127 = arith.constant 2.000000e+00 : f32
      %308 = arith.divf %307, %cst_127 : f32
      %c0_128 = arith.constant 0 : index
      %c0_129 = arith.constant 0 : index
      %309 = vector.load %arg5[%c0_128, %c0_129] : memref<2x128xf32, #tpu.memory_space<vmem>>, vector<2x128xf32>
      %310 = vector.shape_cast %309 : vector<2x128xf32> to vector<1x2x128xf32>
      %cst_130 = arith.constant dense<0.000000e+00> : vector<1xf32>
      %311 = vector.multi_reduction <add>, %310, %cst_130 [1, 2] : vector<1x2x128xf32> to vector<1xf32>
      %312 = vector.shape_cast %311 : vector<1xf32> to vector<1x1x1xf32>
      %313 = vector.extract %312[0, 0, 0] : f32 from vector<1x1x1xf32>
      %cst_131 = arith.constant 0.001953125 : f32
      %314 = arith.mulf %313, %cst_131 : f32
      %cst_132 = arith.constant 1.000000e-01 : f32
      %315 = arith.mulf %cst_132, %308 : f32
      %cst_133 = arith.constant 0.00999999977 : f32
      %316 = arith.mulf %cst_133, %314 : f32
      %317 = arith.subf %315, %316 : f32
      %c0_134 = arith.constant 0 : index
      %c0_135 = arith.constant 0 : index
      %318 = memref.load %arg3[%c0_134, %c0_135] : memref<1x1xf32, #tpu.memory_space<smem>>
      memref.store %317, %arg3[%c0_134, %c0_135] : memref<1x1xf32, #tpu.memory_space<smem>>
    } else {
    }
    return
  }
  func.func @transform_0(%arg0: i32) -> (i32, i32) {
    %c0_i32 = arith.constant 0 : i32
    %c0_i32_0 = arith.constant 0 : i32
    return %c0_i32, %arg0 : i32, i32
  }
  func.func @transform_1(%arg0: i32) -> (i32, i32) {
    %c0_i32 = arith.constant 0 : i32
    %c0_i32_0 = arith.constant 0 : i32
    return %c0_i32, %arg0 : i32, i32
  }
  func.func @transform_2(%arg0: i32) -> (i32, i32) {
    %c0_i32 = arith.constant 0 : i32
    %c0_i32_0 = arith.constant 0 : i32
    %c0_i32_1 = arith.constant 0 : i32
    return %c0_i32, %c0_i32_0 : i32, i32
  }
}

</mosaic_0001>

<llo_original>
// kernel: tpu_custom_call.1
$region0: #{tpu_custom_call.1}
  #allocation0 [shape = 'u32[]', space=smem, size = 0x4, offset = 0x4, fixed_abs, tag = 'smem constant byte address 0x4 - core index']
  #allocation1 [shape = 'u32[72,128]{1,0:T(1,128)}', space=vmem, size = 0x9000, scoped, tag = 'internal scratch']
  #allocation2 [shape = 'f32[2,128]{1,0:T(2,128)}', space=vmem, size = 0x400, scoped, tag = 'scratch operand']
  #allocation3 [shape = 'f32[2,128]{1,0:T(2,128)}', space=vmem, size = 0x400, scoped, tag = 'scratch operand']
  #allocation4 [shape = 'f32[5,2,128]{2,1,0:T(2,128)}', space=vmem, size = 0x1400, scoped, tag = 'scratch operand']
  %s0 = inlined_call_operand.hbm [shape: f32[8,256], index: 0, kind: input, shape index: {}]
  %s1 = inlined_call_operand.hbm [shape: s32[2,256], index: 1, kind: input, shape index: {}]
  %s2 = inlined_call_operand.hbm [shape: f32[1,1], index: 2, kind: output, shape index: {}]
  %s3 = sld [smem:[#allocation0]]
  $region57: #{tpu_custom_call.1} parent=0
    _
  %s5 = ssub.s32 1, %s3
  %s6 = scalar_select 0, %s5, %s3
  $region1: #{tpu_custom_call.1} parent=0
    #allocation5 [shape = 'u8[8192]{0}', space=vmem, size = 0x2000, scoped, tag = 'input window, operand 0']
    #allocation6 [shape = 's32[2]{0}', space=sflag, size = 0x8, scoped, tag = 'scoped memory for tpu_custom_call.1']
    #allocation7 [shape = 's32[2]{0}', space=sflag, size = 0x8, scoped, tag = 'scoped memory for tpu_custom_call.1']
    #allocation8 [shape = 'u8[2048]{0}', space=vmem, size = 0x800, scoped, tag = 'input window, operand 1']
    #allocation9 [shape = 's32[2]{0}', space=sflag, size = 0x8, scoped, tag = 'scoped memory for tpu_custom_call.1']
    #allocation10 [shape = 'u8[512]{0}', space=smem, size = 0x200, scoped, tag = 'output window, operand 0, single buffered']
    %7 = vsyncpa [#allocation6], 0
    %s8 = scalar_lea.sflag [#allocation6], 1
    %9 = vsyncpa %s8, 0
    %10 = vsyncpa [#allocation9], 0
    %s11 = scalar_lea.sflag [#allocation9], 1
    %12 = vsyncpa %s11, 0
    %13 = vsyncpa [#allocation7], 0
    loop: start=0, step=1, limit=4
    $region2: #{tpu_custom_call.1} parent=1 // loop_pre_header
      _
    $region3: #{tpu_custom_call.1} parent=1 // loop_header
      %s15 = sphi 0, %s19
      %p16 = scmp.ge.s32.totalorder %s15, 4
      %s25 = sphi 0, %s27
      %s28 = sphi 0, %s25
      %s29 = sphi 0, %s28
      %s45 = sphi 0, %s29
      %s51 = sphi 0, %s53
      %s54 = sphi 0, %s51
      %s55 = sphi 0, %s54
      %s71 = sphi 0, %s55
      %s75 = sphi 0, %s75
      %s77 = sphi 0, %s75
      %s78 = sphi 0, %s77
      %s92 = sphi 0, %s78
    $region4: #{tpu_custom_call.1} parent=1 // loop_header_branch
      %18 = sbr.rel (%p16) target = $region8
    $region5: #{tpu_custom_call.1} parent=1 // loop_body
      %s20 = ssub.s32 %s15, 1
      %s21 = ssub.s32 %s15, 2
      %s22 = sadd.s32 %s15, 1
      %s23 = ssub.s32 %s15, %s22
      %p24 = scmp.eq.s32.totalorder %s23, 0
      %s26 = sadd.s32 %s25, 1
      %s27 = scalar_select %p24, %s25, %s26
      %p30 = pneg %p24
      %p31 = scmp.eq.s32.totalorder %s15, 1
      %p32 = por %p30, %p31
      %p33 = scmp.ne.s32.totalorder %s25, %s28
      %p34 = scmp.eq.s32.totalorder %s15, 0
      %p35 = por %p33, %p34
      %p36 = scmp.ne.s32.totalorder %s25, %s28
      %p37 = scmp.eq.s32.totalorder %s20, 1
      %p38 = por %p36, %p37
      %p39 = scmp.ne.s32.totalorder %s28, %s29
      %p40 = scmp.eq.s32.totalorder %s20, 0
      %p41 = por %p39, %p40
      %p42 = scmp.ne.s32.totalorder %s28, %s29
      %p43 = scmp.eq.s32.totalorder %s21, 1
      %p44 = por %p42, %p43
      %p46 = scmp.ne.s32.totalorder %s29, %s45
      %p47 = scmp.eq.s32.totalorder %s21, 0
      %p48 = por %p46, %p47
      %s49 = ssub.s32 %s15, %s22
      %p50 = scmp.eq.s32.totalorder %s49, 0
      %s52 = sadd.s32 %s51, 1
      %s53 = scalar_select %p50, %s51, %s52
      %p56 = pneg %p50
      %p57 = scmp.eq.s32.totalorder %s15, 1
      %p58 = por %p56, %p57
      %p59 = scmp.ne.s32.totalorder %s51, %s54
      %p60 = scmp.eq.s32.totalorder %s15, 0
      %p61 = por %p59, %p60
      %p62 = scmp.ne.s32.totalorder %s51, %s54
      %p63 = scmp.eq.s32.totalorder %s20, 1
      %p64 = por %p62, %p63
      %p65 = scmp.ne.s32.totalorder %s54, %s55
      %p66 = scmp.eq.s32.totalorder %s20, 0
      %p67 = por %p65, %p66
      %p68 = scmp.ne.s32.totalorder %s54, %s55
      %p69 = scmp.eq.s32.totalorder %s21, 1
      %p70 = por %p68, %p69
      %p72 = scmp.ne.s32.totalorder %s55, %s71
      %p73 = scmp.eq.s32.totalorder %s21, 0
      %p74 = por %p72, %p73
      %s76 = sadd.s32 %s75, 1
      %p79 = scmp.eq.s32.totalorder %s15, 1
      %p80 = scmp.ne.s32.totalorder %s75, %s77
      %p81 = scmp.eq.s32.totalorder %s15, 0
      %p82 = por %p80, %p81
      %p83 = scmp.ne.s32.totalorder %s75, %s77
      %p84 = scmp.eq.s32.totalorder %s20, 1
      %p85 = por %p83, %p84
      %p86 = scmp.ne.s32.totalorder %s77, %s78
      %p87 = scmp.eq.s32.totalorder %s20, 0
      %p88 = por %p86, %p87
      %p89 = scmp.ne.s32.totalorder %s77, %s78
      %p90 = scmp.eq.s32.totalorder %s21, 1
      %p91 = por %p89, %p90
      %p93 = scmp.ne.s32.totalorder %s78, %s92
      %p94 = scmp.eq.s32.totalorder %s21, 0
      %p95 = por %p93, %p94
      %p96 = scmp.le.s32.totalorder 1, %s15
      %p97 = scmp.lt.s32.totalorder %s15, 3
      %p98 = pnand %p96, %p97
      %p99 = pneg %p98
      // Predicated region
      $region9: #{tpu_custom_call.1} parent=5 // pred_check
        _
      $region10: #{tpu_custom_call.1} parent=5 // pred_check_branch
        %101 = sbr.rel (%p98) target = $region12
      $region11: #{tpu_custom_call.1} parent=5 // pred_region
        %s102 = ssub.s32 %s15, 1
      $region12: #{tpu_custom_call.1} parent=5 // pred_fallthru
        _
      %p103 = scmp.lt.s32.totalorder %s15, 2
      // Predicated region
      $region13: #{tpu_custom_call.1} parent=5 // pred_check
        %p104 = pneg %p103
      $region14: #{tpu_custom_call.1} parent=5 // pred_check_branch
        %106 = sbr.rel (%p104) target = $region16
      $region15: #{tpu_custom_call.1} parent=5 // pred_region
        // Predicated region
        $region17: #{tpu_custom_call.1} parent=15 // pred_check
          %p107 = pneg %p35
        $region18: #{tpu_custom_call.1} parent=15 // pred_check_branch
          %109 = sbr.rel (%p107) target = $region20
        $region19: #{tpu_custom_call.1} parent=15 // pred_region
          %s110 = sand.u32 %s25, 1
          %s111 = scalar_lea.sflag [#allocation6], %s110
          %s112 = sand.u32 %s25, 1
          %s113 = smul.addr %s112, 8
          %s114 = scalar_lea.vmem [#allocation5], %s113
          %116 = vsyncadd %s111, 0
          %s117 = smul.addr %s15, 8
          %s118 = scalar_lea.hbm %s0, %s117
          %s120 = sshll.u32 %s118, 4
          %s121 = int_to_ptr.hbm [resolvable:$true] %s120
          %s122 = sshll.u32 %s114, 4
          %s123 = int_to_ptr.vmem [resolvable:$true] %s122
          %125 = dma.hbm_to_vmem [thread:$0]  %s121, 128, %s123, %s111
        $region20: #{tpu_custom_call.1} parent=15 // pred_fallthru
          _
        // Predicated region
        $region21: #{tpu_custom_call.1} parent=15 // pred_check
          %p126 = pneg %p61
        $region22: #{tpu_custom_call.1} parent=15 // pred_check_branch
          %128 = sbr.rel (%p126) target = $region24
        $region23: #{tpu_custom_call.1} parent=15 // pred_region
          %s129 = sand.u32 %s51, 1
          %s130 = scalar_lea.sflag [#allocation9], %s129
          %s131 = sand.u32 %s51, 1
          %s132 = smul.addr %s131, 2
          %s133 = scalar_lea.vmem [#allocation8], %s132
          %135 = vsyncadd %s130, 0
          %s136 = smul.addr %s15, 2
          %s137 = scalar_lea.hbm %s1, %s136
          %s139 = sshll.u32 %s137, 4
          %s140 = int_to_ptr.hbm [resolvable:$true] %s139
          %s141 = sshll.u32 %s133, 4
          %s142 = int_to_ptr.vmem [resolvable:$true] %s141
          %144 = dma.hbm_to_vmem [thread:$0]  %s140, 32, %s142, %s130
        $region24: #{tpu_custom_call.1} parent=15 // pred_fallthru
          _
      $region16: #{tpu_custom_call.1} parent=5 // pred_fallthru
        _
      %p145 = scmp.le.s32.totalorder 1, %s15
      %p146 = scmp.lt.s32.totalorder %s15, 3
      %p147 = pnand %p145, %p146
      %p148 = pneg %p147
      // Predicated region
      $region25: #{tpu_custom_call.1} parent=5 // pred_check
        _
      $region26: #{tpu_custom_call.1} parent=5 // pred_check_branch
        %150 = sbr.rel (%p147) target = $region28
      $region27: #{tpu_custom_call.1} parent=5 // pred_region
        %s151 = ssub.s32 %s15, 1
        %s152 = sand.u32 %s28, 1
        %s153 = scalar_lea.sflag [#allocation6], %s152
        %s154 = sand.u32 %s28, 1
        %s155 = smul.addr %s154, 8
        %s156 = scalar_lea.vmem [#allocation5], %s155
        // Predicated region
        $region29: #{tpu_custom_call.1} parent=27 // pred_check
          %p157 = pneg %p41
        $region30: #{tpu_custom_call.1} parent=27 // pred_check_branch
          %159 = sbr.rel (%p157) target = $region32
        $region31: #{tpu_custom_call.1} parent=27 // pred_region
          %161 = dma.done %s153, 128
        $region32: #{tpu_custom_call.1} parent=27 // pred_fallthru
          _
        %s162 = sand.u32 %s54, 1
        %s163 = scalar_lea.sflag [#allocation9], %s162
        %s164 = sand.u32 %s54, 1
        %s165 = smul.addr %s164, 2
        %s166 = scalar_lea.vmem [#allocation8], %s165
        // Predicated region
        $region33: #{tpu_custom_call.1} parent=27 // pred_check
          %p167 = pneg %p67
        $region34: #{tpu_custom_call.1} parent=27 // pred_check_branch
          %169 = sbr.rel (%p167) target = $region36
        $region35: #{tpu_custom_call.1} parent=27 // pred_region
          %171 = dma.done %s163, 32
        $region36: #{tpu_custom_call.1} parent=27 // pred_fallthru
          _
        %s172 = sand.u32 %s28, 1
        %s173 = scalar_lea.sflag [#allocation6], %s172
        %s174 = sand.u32 %s28, 1
        %s175 = smul.addr %s174, 8
        %s176 = scalar_lea.vmem [#allocation5], %s175
        %p177 = pneg %p41
        %p178 = pneg %p38
        %s179 = sand.u32 %s54, 1
        %s180 = scalar_lea.sflag [#allocation9], %s179
        %s181 = sand.u32 %s54, 1
        %s182 = smul.addr %s181, 2
        %s183 = scalar_lea.vmem [#allocation8], %s182
        %p184 = pneg %p67
        %p185 = pneg %p64
        %p186 = pneg %p88
        %p187 = pneg %p85
        %p188 = scmp.eq.s32.totalorder %s20, 0
        // Predicated region
        $region37: #{tpu_custom_call.1} parent=27 // pred_check
          %p189 = pneg %p188
        $region38: #{tpu_custom_call.1} parent=27 // pred_check_branch
          %191 = sbr.rel (%p189) target = $region40
        $region39: #{tpu_custom_call.1} parent=27 // pred_region
          %192 = vst [vmem:[#allocation2] sm:$0x3] 0.0
          %193 = vst [vmem:[#allocation3] sm:$0x3] 0.0
          %194 = vst [vmem:[#allocation4] sm:$0x3] 0.0
          %195 = vst [vmem:[#allocation4 + $0x2] sm:$0x3] 0.0
          %196 = vst [vmem:[#allocation4 + $0x4] sm:$0x3] 0.0
          %197 = vst [vmem:[#allocation4 + $0x6] sm:$0x3] 0.0
          %198 = vst [vmem:[#allocation4 + $0x8] sm:$0x3] 0.0
          %s199 = scalar_lea.smem [#allocation10], 0
          %200 = sst [smem:[%s199]] 0.0
        $region40: #{tpu_custom_call.1} parent=27 // pred_fallthru
          _
        %v201 = vld [vmem:[%s156] sm:$0xff]
        %v202 = vlog2.pop %v201
        %v203 = vmul.f32 %v202, 0.6931472
        %v204 = vsub.f32 %v201, 1.0
        %v205 = vadd.f32 %v204, 60.458332
        %v206 = vmul.f32 %v205, %v204
        %v207 = vadd.f32 %v206, 1599.0425
        %v208 = vmul.f32 %v207, %v204
        %v209 = vadd.f32 %v208, 24165.51
        %v210 = vmul.f32 %v209, %v204
        %v211 = vadd.f32 %v210, 228235.22
        %v212 = vmul.f32 %v211, %v204
        %v213 = vadd.f32 %v212, 1379496.3
        %v214 = vmul.f32 %v213, %v204
        %v215 = vadd.f32 %v214, 5210869.0
        %v216 = vmul.f32 %v215, %v204
        %v217 = vadd.f32 %v216, 11246929.0
        %v218 = vmul.f32 %v217, %v204
        %v219 = vadd.f32 %v218, 10619610.0
        %v220 = vadd.f32 %v204, 36.0
        %v221 = vmul.f32 %v220, %v204
        %v222 = vadd.f32 %v221, 546.0
        %v223 = vmul.f32 %v222, %v204
        %v224 = vadd.f32 %v223, 4536.0
        %v225 = vmul.f32 %v224, %v204
        %v226 = vadd.f32 %v225, 22449.0
        %v227 = vmul.f32 %v226, %v204
        %v228 = vadd.f32 %v227, 67284.0
        %v229 = vmul.f32 %v228, %v204
        %v230 = vadd.f32 %v229, 118124.0
        %v231 = vmul.f32 %v230, %v204
        %v232 = vadd.f32 %v231, 109584.0
        %v233 = vmul.f32 %v232, %v204
        %v234 = vadd.f32 %v233, 40320.0
        %v235 = vadd.f32 %v204, 7.5
        %v236 = vadd.f32 %v204, 0.5
        %v237 = vlog2.pop %v235
        %v238 = vmul.f32 %v237, 0.6931472
        %v239 = vmul.f32 %v236, %v238
        %v240 = vadd.f32 %v239, 0.9189385
        %v241 = vsub.f32 %v240, %v235
        %v242 = vrcp.pop %v234
        %v243 = vmul.f32 %v234, %v242
        %v244 = vsub.f32 1.0, %v243
        %v245 = vmul.f32 %v242, %v244
        %v246 = vadd.f32 %v242, %v245
        %vm247 = vweird.f32 %v234
        %vm248 = vweird.f32 %v242
        %vm249 = vmor %vm247, %vm248
        %v250 = vsel %vm249, %v242, %v246
        %v251 = vand.u32 2147483647, %v234
        %vm252 = vcmp.eq.f32.partialorder %v251, 8.507059e+37
        %v253 = vand.u32 %v234, 2147483648
        %v254 = vor.u32 1.1754944e-38, %v253
        %v255 = vsel %vm252, %v254, %v250
        %v256 = vmul.f32 %v219, %v255
        %v257 = vlog2.pop %v256
        %v258 = vmul.f32 %v257, 0.6931472
        %v259 = vadd.f32 %v241, %v258
        %v260 = vmul.f32 %v204, %v203
        %v261 = vmul.f32 %v201, %v203
        %v262 = vld [vmem:[%s166] sm:$0x3]
        %v264 = vrot.slane %v201, 2
        %v266 = vadd.f32 %v201, %v264
        %v268 = vrot.slane %v259, 2
        %v270 = vadd.f32 %v259, %v268
        %v272 = vrot.slane %v260, 2
        %v274 = vadd.f32 %v260, %v272
        %v276 = vrot.slane %v261, 2
        %v278 = vadd.f32 %v261, %v276
        %v279 = vrot.slane %v201, 6
        %vm281 = vcmp.gt.f32.partialorder %v201, %v279
        %v282 = vsel %vm281, %v201, %v279
        %v283 = vsel %vm281, 1, 0
        %v284 = vrot.slane %v201, 4
        %v286 = vadd.f32 %v266, %v284
        %v287 = vrot.slane %v259, 4
        %v289 = vadd.f32 %v270, %v287
        %v290 = vrot.slane %v260, 4
        %v292 = vadd.f32 %v274, %v290
        %v293 = vrot.slane %v261, 4
        %v295 = vadd.f32 %v278, %v293
        %v297 = vrot.slane %v282, 6
        %vm299 = vcmp.gt.f32.partialorder %v201, %v297
        %v300 = vsel %vm299, %v201, %v297
        %v301 = vrot.slane %v283, 6
        %v302 = vsel %vm299, 2, %v301
        %v303 = vadd.f32 %v286, %v279
        %v304 = vrot.slane %v259, 6
        %v306 = vadd.f32 %v289, %v304
        %v307 = vrot.slane %v260, 6
        %v309 = vadd.f32 %v292, %v307
        %v310 = vrot.slane %v261, 6
        %v312 = vadd.f32 %v295, %v310
        %v314 = vrot.slane %v300, 6
        %vm316 = vcmp.gt.f32.partialorder %v201, %v314
        %v317 = vsel %vm316, %v201, %v314
        %v318 = vrot.slane %v302, 6
        %v319 = vsel %vm316, 3, %v318
        %v320 = vlog2.pop %v303
        %v321 = vmul.f32 %v320, 0.6931472
        %v322 = vrcp.pop %v303
        %v323 = vsub.f32 %v303, 1.0
        %v324 = vadd.f32 %v323, 60.458332
        %v325 = vmul.f32 %v324, %v323
        %v326 = vadd.f32 %v325, 1599.0425
        %v327 = vmul.f32 %v326, %v323
        %v328 = vadd.f32 %v327, 24165.51
        %v329 = vmul.f32 %v328, %v323
        %v330 = vadd.f32 %v329, 228235.22
        %v331 = vmul.f32 %v330, %v323
        %v332 = vadd.f32 %v331, 1379496.3
        %v333 = vmul.f32 %v332, %v323
        %v334 = vadd.f32 %v333, 5210869.0
        %v335 = vmul.f32 %v334, %v323
        %v336 = vadd.f32 %v335, 11246929.0
        %v337 = vmul.f32 %v336, %v323
        %v338 = vadd.f32 %v337, 10619610.0
        %v339 = vadd.f32 %v323, 36.0
        %v340 = vmul.f32 %v339, %v323
        %v341 = vadd.f32 %v340, 546.0
        %v342 = vmul.f32 %v341, %v323
        %v343 = vadd.f32 %v342, 4536.0
        %v344 = vmul.f32 %v343, %v323
        %v345 = vadd.f32 %v344, 22449.0
        %v346 = vmul.f32 %v345, %v323
        %v347 = vadd.f32 %v346, 67284.0
        %v348 = vmul.f32 %v347, %v323
        %v349 = vadd.f32 %v348, 118124.0
        %v350 = vmul.f32 %v349, %v323
        %v351 = vadd.f32 %v350, 109584.0
        %v352 = vmul.f32 %v351, %v323
        %v353 = vadd.f32 %v352, 40320.0
        %v354 = vadd.f32 %v323, 7.5
        %v355 = vadd.f32 %v323, 0.5
        %v356 = vlog2.pop %v354
        %v357 = vmul.f32 %v356, 0.6931472
        %v358 = vmul.f32 %v355, %v357
        %v359 = vadd.f32 %v358, 0.9189385
        %v360 = vsub.f32 %v359, %v354
        %v361 = vrcp.pop %v353
        %v362 = vmul.f32 %v353, %v361
        %v363 = vsub.f32 1.0, %v362
        %v364 = vmul.f32 %v361, %v363
        %v365 = vadd.f32 %v361, %v364
        %vm366 = vweird.f32 %v353
        %vm367 = vweird.f32 %v361
        %vm368 = vmor %vm366, %vm367
        %v369 = vsel %vm368, %v361, %v365
        %v370 = vand.u32 2147483647, %v353
        %vm371 = vcmp.eq.f32.partialorder %v370, 8.507059e+37
        %v372 = vand.u32 %v353, 2147483648
        %v373 = vor.u32 1.1754944e-38, %v372
        %v374 = vsel %vm371, %v373, %v369
        %v375 = vmul.f32 %v338, %v374
        %v376 = vlog2.pop %v375
        %v377 = vmul.f32 %v376, 0.6931472
        %v378 = vadd.f32 %v360, %v377
        %v379 = vsub.f32 %v378, %v306
        %v380 = vadd.f32 %v379, %v309
        %v381 = vsub.f32 %v303, 4.0
        %v382 = vmul.f32 %v381, %v321
        %v383 = vsub.f32 %v380, %v382
        %v384 = vmul.f32 %v312, %v322
        %v385 = vsub.f32 %v321, %v384
        %v386 = vld [vmem:[#allocation2] sm:$0x3]
        %v387 = vadd.f32 %v386, %v383
        %388 = vst [vmem:[#allocation2] sm:$0x3] %v387
        %v389 = vld [vmem:[#allocation3] sm:$0x3]
        %v390 = vadd.f32 %v389, %v385
        %391 = vst [vmem:[#allocation3] sm:$0x3] %v390
        %v393 = vrot.slane %v322, 2
        %v395 = vmul.f32 %v317, %v393
        %v396 = vrot.slane %v262, 2
        %vm397 = vcmp.eq.s32.totalorder %v319, %v396
        %v398 = vsel %vm397, 1, 0
        %v399 = vcvt.s32.f32 %v398
        %v400 = vsub.f32 %v399, %v395
        %v401 = vmul.f32 %v395, 5.0
        %v402 = vcvt.f32.s32.to.zero.pseudo %v401
        %vm403 = vcmp.lt.s32.totalorder %v402, 4
        %v404 = vsel %vm403, %v402, 4
        %v405 = vld [vmem:[#allocation4] sm:$0x3]
        %vm406 = vcmp.eq.s32.totalorder %v404, 0
        %v407 = vsel %vm406, %v400, 0.0
        %v409 = vrot.slane %v407, 6
        %v411 = vadd.f32 %v405, %v409
        %412 = vst [vmem:[#allocation4] sm:$0x3] %v411
        %s413 = scalar_lea.vmem [#allocation4], 2
        %v414 = vld [vmem:[%s413] sm:$0x3]
        %vm415 = vcmp.eq.s32.totalorder %v404, 1
        %v416 = vsel %vm415, %v400, 0.0
        %v418 = vrot.slane %v416, 6
        %v420 = vadd.f32 %v414, %v418
        %421 = vst [vmem:[%s413] sm:$0x3] %v420
        %s422 = scalar_lea.vmem [#allocation4], 4
        %v423 = vld [vmem:[%s422] sm:$0x3]
        %vm424 = vcmp.eq.s32.totalorder %v404, 2
        %v425 = vsel %vm424, %v400, 0.0
        %v427 = vrot.slane %v425, 6
        %v429 = vadd.f32 %v423, %v427
        %430 = vst [vmem:[%s422] sm:$0x3] %v429
        %s431 = scalar_lea.vmem [#allocation4], 6
        %v432 = vld [vmem:[%s431] sm:$0x3]
        %vm433 = vcmp.eq.s32.totalorder %v404, 3
        %v434 = vsel %vm433, %v400, 0.0
        %v436 = vrot.slane %v434, 6
        %v438 = vadd.f32 %v432, %v436
        %439 = vst [vmem:[%s431] sm:$0x3] %v438
        %s440 = scalar_lea.vmem [#allocation4], 8
        %v441 = vld [vmem:[%s440] sm:$0x3]
        %vm442 = vcmp.eq.s32.totalorder %v404, 4
        %v443 = vsel %vm442, %v400, 0.0
        %v445 = vrot.slane %v443, 6
        %v447 = vadd.f32 %v441, %v445
        %448 = vst [vmem:[%s440] sm:$0x3] %v447
        %p449 = scmp.eq.s32.totalorder %s20, 1
        // Predicated region
        $region41: #{tpu_custom_call.1} parent=27 // pred_check
          %p450 = pneg %p449
        $region42: #{tpu_custom_call.1} parent=27 // pred_check_branch
          %452 = sbr.rel (%p450) target = $region44
        $region43: #{tpu_custom_call.1} parent=27 // pred_region
          %v453 = vld [vmem:[#allocation2] sm:$0x3]
          %vm454 = vcmask 1041408
          %v455 = vsel %vm454, %v453, 0.0
          %456 = vadd.xlane.f32.xlu0 %v455
          %v457 = vpop.xlane.xlu0 %456
          %v458 = vmul.f32 %v457, 0.00390625
          %v459 = vld [vmem:[#allocation4] sm:$0x3]
          %v460 = vsel %vm454, %v459, 0.0
          %461 = vadd.xlane.f32.xlu0 %v460
          %v462 = vpop.xlane.xlu0 %461
          %v463 = vand.u32 2147483647, %v462
          %v464 = vadd.f32 %v463, 0.0
          %v465 = vld [vmem:[%s413] sm:$0x3]
          %v466 = vsel %vm454, %v465, 0.0
          %467 = vadd.xlane.f32.xlu0 %v466
          %v468 = vpop.xlane.xlu0 %467
          %v469 = vand.u32 2147483647, %v468
          %v470 = vadd.f32 %v464, %v469
          %v471 = vld [vmem:[%s422] sm:$0x3]
          %v472 = vsel %vm454, %v471, 0.0
          %473 = vadd.xlane.f32.xlu0 %v472
          %v474 = vpop.xlane.xlu0 %473
          %v475 = vand.u32 2147483647, %v474
          %v476 = vadd.f32 %v470, %v475
          %v477 = vld [vmem:[%s431] sm:$0x3]
          %v478 = vsel %vm454, %v477, 0.0
          %479 = vadd.xlane.f32.xlu0 %v478
          %v480 = vpop.xlane.xlu0 %479
          %v481 = vand.u32 2147483647, %v480
          %v482 = vadd.f32 %v476, %v481
          %v483 = vld [vmem:[%s440] sm:$0x3]
          %v484 = vsel %vm454, %v483, 0.0
          %485 = vadd.xlane.f32.xlu0 %v484
          %v486 = vpop.xlane.xlu0 %485
          %v487 = vand.u32 2147483647, %v486
          %v488 = vadd.f32 %v482, %v487
          %v489 = vmul.f32 %v488, 0.00390625
          %v490 = vmax.f32 %v489, 1e-12
          %v491 = vlog2.pop %v490
          %v492 = vmul.f32 %v491, 0.6931472
          %v493 = vsub.f32 0.0, %v492
          %v494 = vsub.f32 0.0, %v458
          %v495 = vmul.f32 %v494, %v493
          %vm496 = vcmask 1024
          %v497 = vsel %vm496, %v495, 0.0
          %498 = vadd.xlane.f32.xlu0 %v497
          %v499 = vpop.xlane.xlu0 %498
          %v500 = vrot.slane %v499, 4
          %v501 = vadd.f32 %v499, %v500
          %v502 = vrot.slane %v501, 2
          %v503 = vadd.f32 %v501, %v502
          %v504 = vrot.slane %v503, 1
          %v505 = vadd.f32 %v503, %v504
          %s506 = vtos %v505
          %v507 = vrcp.pop 2.0
          %v508 = vmul.f32 2.0, %v507
          %v509 = vsub.f32 1.0, %v508
          %v510 = vmul.f32 %v507, %v509
          %v511 = vadd.f32 %v507, %v510
          %vm512 = vweird.f32 %v507
          %v513 = vsel %vm512, %v507, %v511
          %s514 = vtos %v513
          %s515 = smul.f32 %s506, %s514
          %v516 = vld [vmem:[#allocation3] sm:$0x3]
          %v517 = vsel %vm454, %v516, 0.0
          %518 = vadd.xlane.f32.xlu0 %v517
          %v519 = vpop.xlane.xlu0 %518
          %v520 = vrot.slane %v519, 4
          %v521 = vadd.f32 %v519, %v520
          %v522 = vrot.slane %v521, 2
          %v523 = vadd.f32 %v521, %v522
          %v524 = vrot.slane %v523, 1
          %v525 = vadd.f32 %v523, %v524
          %s526 = vtos %v525
          %s527 = smul.f32 %s526, 0.001953125
          %s528 = smul.f32 %s515, 0.1
          %s529 = smul.f32 %s527, 0.01
          %s530 = ssub.f32 %s528, %s529
          %s531 = scalar_lea.smem [#allocation10], 0
          %532 = sst [smem:[%s531]] %s530
        $region44: #{tpu_custom_call.1} parent=27 // pred_fallthru
          _
        // Predicated region
        $region45: #{tpu_custom_call.1} parent=27 // pred_check
          %p533 = pneg %p85
        $region46: #{tpu_custom_call.1} parent=27 // pred_check_branch
          %535 = sbr.rel (%p533) target = $region48
        $region47: #{tpu_custom_call.1} parent=27 // pred_region
          %537 = vsyncadd [#allocation7], 0
          %s539 = sshll.u32 %s2, 4
          %s540 = int_to_ptr.hbm [resolvable:$true] %s539
          %542 = dma.smem_to_hbm [#allocation10], 16, %s540, [#allocation7]
        $region48: #{tpu_custom_call.1} parent=27 // pred_fallthru
          _
        // Predicated region
        $region49: #{tpu_custom_call.1} parent=27 // pred_check
          %p543 = pneg %p85
        $region50: #{tpu_custom_call.1} parent=27 // pred_check_branch
          %545 = sbr.rel (%p543) target = $region52
        $region51: #{tpu_custom_call.1} parent=27 // pred_region
          %547 = dma.done [#allocation7], 16
        $region52: #{tpu_custom_call.1} parent=27 // pred_fallthru
          _
        %548 = sfence
      $region28: #{tpu_custom_call.1} parent=5 // pred_fallthru
        _
      %p549 = scmp.le.s32.totalorder 2, %s15
      // Predicated region
      $region53: #{tpu_custom_call.1} parent=5 // pred_check
        %p550 = pneg %p549
      $region54: #{tpu_custom_call.1} parent=5 // pred_check_branch
        %552 = sbr.rel (%p550) target = $region56
      $region55: #{tpu_custom_call.1} parent=5 // pred_region
        %s553 = ssub.s32 %s15, 2
      $region56: #{tpu_custom_call.1} parent=5 // pred_fallthru
        _
    $region6: #{tpu_custom_call.1} parent=1 // loop_footer
      %s19 = sadd.s32 1, %s15
    $region7: #{tpu_custom_call.1} parent=1 // loop_footer_branch
      %14 = sbr.rel target = $region3
    $region8: #{tpu_custom_call.1} parent=1 // loop_exit
      _
    %554 = vsyncpa [#allocation6], 1
    %s555 = scalar_lea.sflag [#allocation6], 1
    %556 = vsyncpa %s555, 1
    %557 = vsyncpa [#allocation9], 1
    %s558 = scalar_lea.sflag [#allocation9], 1
    %559 = vsyncpa %s558, 1
    %560 = vsyncpa [#allocation7], 1
    %s561 = scalar_lea.sflag [#allocation7], 1
    %562 = vsyncpa %s561, 1

</llo_original>
